<compile_context>
chip_gen: v5e
topology: v5e:2x2
jax: 0.10.0
libtpu: 0.0.40
codegen_flags: <defaults>
</compile_context>

<pallas_src>
import math
import numpy as np
import jax
import jax.numpy as jnp
from jax.experimental import pallas as pl
from jax.experimental.pallas import tpu as pltpu


# ----------------------------------------------------------------------------
# Bicubic upsample (F.interpolate(mode='bicubic', align_corners=False))
# as per-plane matmuls Wh @ x @ Ww^T, all planes in ONE pallas_call.
# ----------------------------------------------------------------------------
def _cubic(x, a=-0.75):
    x = abs(x)
    if x <= 1.0:
        return (a + 2.0) * x ** 3 - (a + 3.0) * x ** 2 + 1.0
    elif x < 2.0:
        return a * x ** 3 - 5.0 * a * x ** 2 + 8.0 * a * x - 4.0 * a
    return 0.0


def bicubic_matrix(in_size, out_size):
    scale = out_size / in_size
    m = np.zeros((out_size, in_size), dtype=np.float32)
    for i in range(out_size):
        src = (i + 0.5) / scale - 0.5
        i0 = math.floor(src)
        frac = src - i0
        ws = [_cubic(frac + 1.0), _cubic(frac), _cubic(1.0 - frac), _cubic(2.0 - frac)]
        for k in range(4):
            idx = min(max(i0 - 1 + k, 0), in_size - 1)
            m[i, idx] += ws[k]
    return m


def bicubic_kernel(x_ref, wh_ref, wwt_ref, o_ref):
    # x_ref: (P, Hin, Win); all planes processed in one invocation (P static).
    P = x_ref.shape[0]
    wh = wh_ref[...]
    wwt = wwt_ref[...]
    for p in range(P):
        t = jnp.dot(wh, x_ref[p], preferred_element_type=jnp.float32)
        o_ref[p] = jnp.dot(t, wwt, preferred_element_type=jnp.float32)


def bicubic_upsample(x_nchw, scale):
    B, C, Hin, Win = x_nchw.shape
    Hout, Wout = Hin * scale, Win * scale
    wh = jnp.asarray(bicubic_matrix(Hin, Hout))
    wwt = jnp.asarray(bicubic_matrix(Win, Wout)).T          # (Win, Wout)
    xf = x_nchw.reshape(B * C, Hin, Win)
    out = pl.pallas_call(
        bicubic_kernel,
        out_shape=jax.ShapeDtypeStruct((B * C, Hout, Wout), jnp.float32),
    )(xf, wh, wwt)
    return out.reshape(B, C, Hout, Wout)


# ----------------------------------------------------------------------------
# Fused front kernel (whole batch, single block):
#   x_t = a*(hr - up) + s*noise   (q_sample on the residual target)
#   f   = conv3x3(concat(x_t, up)) + b + time_bias
# The channel concat is expressed as a weight split (w_xt / w_up), so no
# in-kernel lane concatenation is needed.  Inputs arrive zero-padded (H+2,W+2).
# ----------------------------------------------------------------------------
def front_kernel(hr_ref, up_ref, n_ref, ca_ref, cs_ref,
                 wxt_ref, wup_ref, bin_ref, tb_ref, o_ref):
    B, Hp, Wp, _ = hr_ref.shape
    H, W = Hp - 2, Wp - 2
    C = o_ref.shape[3]

    a = ca_ref[...]                                          # (B,1,1,1)
    s = cs_ref[...]                                          # (B,1,1,1)
    up = up_ref[...]                                         # (B,Hp,Wp,3)
    xt = a * (hr_ref[...] - up) + s * n_ref[...]             # padded x_t

    acc = jnp.zeros((B * H * W, C), jnp.float32)
    for ky in range(3):
        for kx in range(3):
            pxt = xt[:, ky:ky + H, kx:kx + W, :].reshape(B * H * W, 3)
            pup = up[:, ky:ky + H, kx:kx + W, :].reshape(B * H * W, 3)
            acc = acc + jnp.dot(pxt.astype(jnp.bfloat16), wxt_ref[ky, kx],
                                preferred_element_type=jnp.float32)
            acc = acc + jnp.dot(pup.astype(jnp.bfloat16), wup_ref[ky, kx],
                                preferred_element_type=jnp.float32)

    f = acc.reshape(B, H, W, C) + bin_ref[...] + tb_ref[...]
    o_ref[...] = f


def front_pallas(hr_p, up_p, n_p, ca, cs, w_xt, w_up, b_in, tbias):
    B, Hp, Wp, _ = hr_p.shape
    H, W = Hp - 2, Wp - 2
    C = w_xt.shape[-1]
    return pl.pallas_call(
        front_kernel,
        out_shape=jax.ShapeDtypeStruct((B, H, W, C), jnp.float32),
    )(hr_p, up_p, n_p, ca, cs, w_xt, w_up, b_in, tbias)


# ----------------------------------------------------------------------------
# Fused NAFNet-style block (whole batch, single block):
#   LayerNorm -> fused 1x1 (C -> 2C) -> stacked 2C depthwise 3x3 -> SimpleGate
#   -> Simplified Channel Attention -> 1x1 -> residual
# Emits a zero-padded (H+2, W+2) feature so conv_out needs no wrapper pad.
# ----------------------------------------------------------------------------
def naf_kernel(x_ref, lng_ref, lnb_ref, w1_ref, b1_ref, dw_ref, db_ref,
               scaw_ref, scab_ref, w2_ref, b2_ref, beta_ref, o_ref, pad_ref):
    B, H, W, C = x_ref.shape
    C2 = 2 * C

    x = x_ref[...]
    # LayerNorm over channels (per pixel), f32 VPU math.
    mu = jnp.mean(x, axis=-1, keepdims=True)
    var = jnp.mean(jnp.square(x - mu), axis=-1, keepdims=True)
    xn = (x - mu) * jax.lax.rsqrt(var + 1e-6)
    xn = xn * lng_ref[...] + lnb_ref[...]

    # Fused 1x1 expand: one (C, 2C) matmul for both branches (bf16 MXU, f32 acc)
    h = jnp.dot(xn.reshape(B * H * W, C).astype(jnp.bfloat16), w1_ref[...],
                preferred_element_type=jnp.float32) + b1_ref[...]
    h = h.reshape(B, H, W, C2)

    # Stacked 2C-channel depthwise 3x3 (single scratch zero-fill).
    pad_ref[...] = jnp.zeros_like(pad_ref)
    pad_ref[:, 1:H + 1, 1:W + 1, :] = h
    d = jnp.zeros((B, H, W, C2), jnp.float32)
    for ky in range(3):
        for kx in range(3):
            d = d + pad_ref[:, ky:ky + H, kx:kx + W, :] * dw_ref[ky, kx]
    d = d + db_ref[...]

    # SimpleGate
    g = d[..., :C] * d[..., C:]

    # Simplified Channel Attention (batched over B in one tiny dot).
    pooled = jnp.mean(g, axis=(1, 2))                        # (B, C)
    attn = jnp.dot(pooled, scaw_ref[...],
                   preferred_element_type=jnp.float32) + scab_ref[...]
    g = g * attn[:, None, None, :]

    out = jnp.dot(g.reshape(B * H * W, C).astype(jnp.bfloat16), w2_ref[...],
                  preferred_element_type=jnp.float32) + b2_ref[...]
    y = x + beta_ref[0, 0] * out.reshape(B, H, W, C)

    # Write zero-padded feature for the following 3x3 conv.
    o_ref[...] = jnp.zeros_like(o_ref)
    o_ref[:, 1:H + 1, 1:W + 1, :] = y


def naf_pallas(x, naf_params):
    B, H, W, C = x.shape
    return pl.pallas_call(
        naf_kernel,
        out_shape=jax.ShapeDtypeStruct((B, H + 2, W + 2, C), jnp.float32),
        scratch_shapes=[pltpu.VMEM((B, H + 2, W + 2, 2 * C), jnp.float32)],
    )(x, *naf_params)


# ----------------------------------------------------------------------------
# Fused back kernel: 3x3 conv_out + L1 loss reduction (scalar), whole batch.
# ----------------------------------------------------------------------------
def back_kernel(fp_ref, noise_ref, w_ref, b_ref, o_ref):
    B, Hp, Wp, C = fp_ref.shape
    H, W = Hp - 2, Wp - 2
    Cout = w_ref.shape[3]

    fp = fp_ref[...]
    acc = jnp.zeros((B * H * W, Cout), jnp.float32)
    for ky in range(3):
        for kx in range(3):
            patch = fp[:, ky:ky + H, kx:kx + W, :].reshape(B * H * W, C)
            acc = acc + jnp.dot(patch.astype(jnp.bfloat16), w_ref[ky, kx],
                                preferred_element_type=jnp.float32)
    pred = (acc + b_ref[...]).reshape(B, H, W, Cout)

    loss = jnp.mean(jnp.abs(pred - noise_ref[...]))
    o_ref[...] = jnp.full((1, 1), loss, jnp.float32)


def back_pallas(f_pad, noise, w_out, b_out):
    return pl.pallas_call(
        back_kernel,
        out_shape=jax.ShapeDtypeStruct((1, 1), jnp.float32),
    )(f_pad, noise, w_out, b_out)


# ----------------------------------------------------------------------------
# Model wrapper
# ----------------------------------------------------------------------------
def time_embedding(t, dim):
    half = dim // 2
    freqs = jnp.exp(-math.log(10000.0) * jnp.arange(half, dtype=jnp.float32)
                    / max(half - 1, 1))
    args = t.astype(jnp.float32)[:, None] * freqs[None, :]
    return jnp.concatenate([jnp.sin(args), jnp.cos(args)], axis=-1)


class NAFDiffPallas:
    def __init__(self, sr_scale=2, width=16, temb_dim=16, timesteps=1000,
                 key=jax.random.PRNGKey(42)):
        self.scale_factor = sr_scale
        self.width = width
        self.temb_dim = temb_dim
        self.num_timesteps = timesteps

        betas = jnp.linspace(1e-4, 2e-2, timesteps, dtype=jnp.float32)
        ac = jnp.cumprod(1.0 - betas)
        self.sqrt_ac = jnp.sqrt(ac)
        self.sqrt_om = jnp.sqrt(1.0 - ac)

        ks = jax.random.split(key, 12)

        def nrm(k, shape, scale):
            return scale * jax.random.normal(k, shape, jnp.float32)

        C = width
        w_in = nrm(ks[0], (3, 3, 6, C), 0.1)
        self.params = {
            # input 3x3 conv, split along input channels (x_t | cond), bf16 MXU weights
            'w_xt': w_in[:, :, :3, :].astype(jnp.bfloat16),
            'w_up': w_in[:, :, 3:, :].astype(jnp.bfloat16),
            'b_in': jnp.zeros((1, 1, 1, C), jnp.float32),
            # output 3x3 conv
            'w_out': nrm(ks[1], (3, 3, C, 3), 0.1).astype(jnp.bfloat16),
            'b_out': jnp.zeros((1, 3), jnp.float32),
            # time-embedding MLP (plain JAX, tiny)
            'wt1': nrm(ks[2], (temb_dim, temb_dim), 0.3),
            'bt1': jnp.zeros((temb_dim,), jnp.float32),
            'wt2': nrm(ks[3], (temb_dim, C), 0.3),
            'bt2': jnp.zeros((C,), jnp.float32),
            # NAF block: [ln_g, ln_b, w1(C,2C), b1, dw(3,3,1,2C), db, scaw, scab, w2, b2, beta]
            'naf': [
                jnp.ones((1, 1, 1, C), jnp.float32),
                jnp.zeros((1, 1, 1, C), jnp.float32),
                jnp.concatenate([nrm(ks[4], (C, C), 0.2),
                                 nrm(ks[5], (C, C), 0.2)], axis=1).astype(jnp.bfloat16),
                jnp.zeros((1, 2 * C), jnp.float32),
                jnp.concatenate([nrm(ks[6], (3, 3, 1, C), 0.2),
                                 nrm(ks[7], (3, 3, 1, C), 0.2)], axis=3),
                jnp.zeros((1, 1, 1, 2 * C), jnp.float32),
                nrm(ks[8], (C, C), 0.2),
                jnp.zeros((1, C), jnp.float32),
                nrm(ks[9], (C, C), 0.2).astype(jnp.bfloat16),
                jnp.zeros((1, C), jnp.float32),
                jnp.ones((1, 1), jnp.float32),
            ],
        }

    def __call__(self, img_hr, img_lr, t=None, key=None):
        # img_hr, img_lr: NCHW float32 (PyTorch convention)
        B = img_hr.shape[0]
        if key is None:
            key = jax.random.PRNGKey(1)
        kt, kn = jax.random.split(key)

        up_nchw = bicubic_upsample(img_lr, self.scale_factor)        # 1 pallas_call
        hr = jnp.transpose(img_hr, (0, 2, 3, 1))                     # NHWC
        up = jnp.transpose(up_nchw, (0, 2, 3, 1))

        noise = jax.random.normal(kn, hr.shape, jnp.float32)
        if t is None:
            t = jax.random.randint(kt, (B,), 0, self.num_timesteps)
        ca = self.sqrt_ac[t].reshape(B, 1, 1, 1)
        cs = self.sqrt_om[t].reshape(B, 1, 1, 1)

        # Zero-pad the three conv inputs once (q_sample is linear, so the
        # padded x_t computed in-kernel equals pad(x_t)).
        pad3 = lambda a: jnp.pad(a, ((0, 0), (1, 1), (1, 1), (0, 0)))
        hr_p, up_p, n_p = pad3(hr), pad3(up), pad3(noise)

        p = self.params
        temb = time_embedding(t, self.temb_dim)
        tbias = (jax.nn.silu(temb @ p['wt1'] + p['bt1']) @ p['wt2']
                 + p['bt2']).reshape(B, 1, 1, self.width)

        # Fused q_sample + concat + conv_in + time bias        (1 pallas_call)
        f = front_pallas(hr_p, up_p, n_p, ca, cs,
                         p['w_xt'], p['w_up'], p['b_in'], tbias)
        # Whole-batch NAF block -> padded feature               (1 pallas_call)
        f_pad = naf_pallas(f, p['naf'])
        # Fused conv_out + L1 loss                              (1 pallas_call)
        loss = back_pallas(f_pad, noise, p['w_out'], p['b_out'])
        return loss[0, 0]


if __name__ == "__main__":
    key = jax.random.PRNGKey(0)
    k_lr, k_hr, k_fwd = jax.random.split(key, 3)

    B, Cimg, Hlr, Wlr, scale = 2, 3, 8, 8, 2
    img_lr = jax.random.normal(k_lr, (B, Cimg, Hlr, Wlr), jnp.float32)
    img_hr = jax.random.normal(k_hr, (B, Cimg, Hlr * scale, Wlr * scale), jnp.float32)

    model = NAFDiffPallas(sr_scale=scale, width=16, temb_dim=16, timesteps=1000)
    loss = model(img_hr, img_lr, t=None, key=k_fwd)
    jax.block_until_ready(loss)
    print("KERNEL_OK")
</pallas_src>

<mosaic_0001>
module attributes {stable_mosaic.version = 11 : i64} {
  func.func @bicubic_kernel(%arg0: memref<6x8x8xf32, #tpu.memory_space<vmem>>, %arg1: memref<16x8xf32, #tpu.memory_space<vmem>>, %arg2: memref<8x16xf32, #tpu.memory_space<vmem>>, %arg3: memref<6x16x16xf32, #tpu.memory_space<vmem>>) attributes {dimension_semantics = [], scalar_prefetch = 0 : i64, scratch_operands = 0 : i64, tpu.core_type = #tpu.core_type<tc>} {
    %c0 = arith.constant 0 : index
    %c0_0 = arith.constant 0 : index
    %0 = vector.load %arg1[%c0, %c0_0] : memref<16x8xf32, #tpu.memory_space<vmem>>, vector<16x8xf32>
    %c0_1 = arith.constant 0 : index
    %c0_2 = arith.constant 0 : index
    %1 = vector.load %arg2[%c0_1, %c0_2] : memref<8x16xf32, #tpu.memory_space<vmem>>, vector<8x16xf32>
    %c0_3 = arith.constant 0 : index
    %c0_4 = arith.constant 0 : index
    %c0_5 = arith.constant 0 : index
    %2 = vector.load %arg0[%c0_3, %c0_4, %c0_5] : memref<6x8x8xf32, #tpu.memory_space<vmem>>, vector<1x8x8xf32>
    %3 = vector.shape_cast %2 : vector<1x8x8xf32> to vector<8x8xf32>
    %cst = arith.constant dense<0.000000e+00> : vector<16x8xf32>
    %4 = tpu.matmul %0, %3, %cst {dimension_numbers = #tpu.dot_dimension_numbers<[1], [0], [0], [1], [0, 0, 1, 1], [], []>} : vector<16x8xf32>, vector<8x8xf32>, vector<16x8xf32> -> vector<16x8xf32>
    %cst_6 = arith.constant dense<0.000000e+00> : vector<16x16xf32>
    %5 = tpu.matmul %4, %1, %cst_6 {dimension_numbers = #tpu.dot_dimension_numbers<[1], [0], [0], [1], [0, 0, 1, 1], [], []>} : vector<16x8xf32>, vector<8x16xf32>, vector<16x16xf32> -> vector<16x16xf32>
    %c0_7 = arith.constant 0 : index
    %c0_8 = arith.constant 0 : index
    %c0_9 = arith.constant 0 : index
    %6 = vector.load %arg3[%c0_7, %c0_8, %c0_9] : memref<6x16x16xf32, #tpu.memory_space<vmem>>, vector<1x16x16xf32>
    %7 = vector.shape_cast %6 : vector<1x16x16xf32> to vector<16x16xf32>
    %8 = vector.shape_cast %5 : vector<16x16xf32> to vector<1x16x16xf32>
    tpu.vector_store %arg3[%c0_7, %c0_8, %c0_9], %8 {strides = array<i32>} : memref<6x16x16xf32, #tpu.memory_space<vmem>>, vector<1x16x16xf32>,
    %c1 = arith.constant 1 : index
    %c0_10 = arith.constant 0 : index
    %c0_11 = arith.constant 0 : index
    %9 = vector.load %arg0[%c1, %c0_10, %c0_11] : memref<6x8x8xf32, #tpu.memory_space<vmem>>, vector<1x8x8xf32>
    %10 = vector.shape_cast %9 : vector<1x8x8xf32> to vector<8x8xf32>
    %cst_12 = arith.constant dense<0.000000e+00> : vector<16x8xf32>
    %11 = tpu.matmul %0, %10, %cst_12 {dimension_numbers = #tpu.dot_dimension_numbers<[1], [0], [0], [1], [0, 0, 1, 1], [], []>} : vector<16x8xf32>, vector<8x8xf32>, vector<16x8xf32> -> vector<16x8xf32>
    %cst_13 = arith.constant dense<0.000000e+00> : vector<16x16xf32>
    %12 = tpu.matmul %11, %1, %cst_13 {dimension_numbers = #tpu.dot_dimension_numbers<[1], [0], [0], [1], [0, 0, 1, 1], [], []>} : vector<16x8xf32>, vector<8x16xf32>, vector<16x16xf32> -> vector<16x16xf32>
    %c1_14 = arith.constant 1 : index
    %c0_15 = arith.constant 0 : index
    %c0_16 = arith.constant 0 : index
    %13 = vector.load %arg3[%c1_14, %c0_15, %c0_16] : memref<6x16x16xf32, #tpu.memory_space<vmem>>, vector<1x16x16xf32>
    %14 = vector.shape_cast %13 : vector<1x16x16xf32> to vector<16x16xf32>
    %15 = vector.shape_cast %12 : vector<16x16xf32> to vector<1x16x16xf32>
    tpu.vector_store %arg3[%c1_14, %c0_15, %c0_16], %15 {strides = array<i32>} : memref<6x16x16xf32, #tpu.memory_space<vmem>>, vector<1x16x16xf32>,
    %c2 = arith.constant 2 : index
    %c0_17 = arith.constant 0 : index
    %c0_18 = arith.constant 0 : index
    %16 = vector.load %arg0[%c2, %c0_17, %c0_18] : memref<6x8x8xf32, #tpu.memory_space<vmem>>, vector<1x8x8xf32>
    %17 = vector.shape_cast %16 : vector<1x8x8xf32> to vector<8x8xf32>
    %cst_19 = arith.constant dense<0.000000e+00> : vector<16x8xf32>
    %18 = tpu.matmul %0, %17, %cst_19 {dimension_numbers = #tpu.dot_dimension_numbers<[1], [0], [0], [1], [0, 0, 1, 1], [], []>} : vector<16x8xf32>, vector<8x8xf32>, vector<16x8xf32> -> vector<16x8xf32>
    %cst_20 = arith.constant dense<0.000000e+00> : vector<16x16xf32>
    %19 = tpu.matmul %18, %1, %cst_20 {dimension_numbers = #tpu.dot_dimension_numbers<[1], [0], [0], [1], [0, 0, 1, 1], [], []>} : vector<16x8xf32>, vector<8x16xf32>, vector<16x16xf32> -> vector<16x16xf32>
    %c2_21 = arith.constant 2 : index
    %c0_22 = arith.constant 0 : index
    %c0_23 = arith.constant 0 : index
    %20 = vector.load %arg3[%c2_21, %c0_22, %c0_23] : memref<6x16x16xf32, #tpu.memory_space<vmem>>, vector<1x16x16xf32>
    %21 = vector.shape_cast %20 : vector<1x16x16xf32> to vector<16x16xf32>
    %22 = vector.shape_cast %19 : vector<16x16xf32> to vector<1x16x16xf32>
    tpu.vector_store %arg3[%c2_21, %c0_22, %c0_23], %22 {strides = array<i32>} : memref<6x16x16xf32, #tpu.memory_space<vmem>>, vector<1x16x16xf32>,
    %c3 = arith.constant 3 : index
    %c0_24 = arith.constant 0 : index
    %c0_25 = arith.constant 0 : index
    %23 = vector.load %arg0[%c3, %c0_24, %c0_25] : memref<6x8x8xf32, #tpu.memory_space<vmem>>, vector<1x8x8xf32>
    %24 = vector.shape_cast %23 : vector<1x8x8xf32> to vector<8x8xf32>
    %cst_26 = arith.constant dense<0.000000e+00> : vector<16x8xf32>
    %25 = tpu.matmul %0, %24, %cst_26 {dimension_numbers = #tpu.dot_dimension_numbers<[1], [0], [0], [1], [0, 0, 1, 1], [], []>} : vector<16x8xf32>, vector<8x8xf32>, vector<16x8xf32> -> vector<16x8xf32>
    %cst_27 = arith.constant dense<0.000000e+00> : vector<16x16xf32>
    %26 = tpu.matmul %25, %1, %cst_27 {dimension_numbers = #tpu.dot_dimension_numbers<[1], [0], [0], [1], [0, 0, 1, 1], [], []>} : vector<16x8xf32>, vector<8x16xf32>, vector<16x16xf32> -> vector<16x16xf32>
    %c3_28 = arith.constant 3 : index
    %c0_29 = arith.constant 0 : index
    %c0_30 = arith.constant 0 : index
    %27 = vector.load %arg3[%c3_28, %c0_29, %c0_30] : memref<6x16x16xf32, #tpu.memory_space<vmem>>, vector<1x16x16xf32>
    %28 = vector.shape_cast %27 : vector<1x16x16xf32> to vector<16x16xf32>
    %29 = vector.shape_cast %26 : vector<16x16xf32> to vector<1x16x16xf32>
    tpu.vector_store %arg3[%c3_28, %c0_29, %c0_30], %29 {strides = array<i32>} : memref<6x16x16xf32, #tpu.memory_space<vmem>>, vector<1x16x16xf32>,
    %c4 = arith.constant 4 : index
    %c0_31 = arith.constant 0 : index
    %c0_32 = arith.constant 0 : index
    %30 = vector.load %arg0[%c4, %c0_31, %c0_32] : memref<6x8x8xf32, #tpu.memory_space<vmem>>, vector<1x8x8xf32>
    %31 = vector.shape_cast %30 : vector<1x8x8xf32> to vector<8x8xf32>
    %cst_33 = arith.constant dense<0.000000e+00> : vector<16x8xf32>
    %32 = tpu.matmul %0, %31, %cst_33 {dimension_numbers = #tpu.dot_dimension_numbers<[1], [0], [0], [1], [0, 0, 1, 1], [], []>} : vector<16x8xf32>, vector<8x8xf32>, vector<16x8xf32> -> vector<16x8xf32>
    %cst_34 = arith.constant dense<0.000000e+00> : vector<16x16xf32>
    %33 = tpu.matmul %32, %1, %cst_34 {dimension_numbers = #tpu.dot_dimension_numbers<[1], [0], [0], [1], [0, 0, 1, 1], [], []>} : vector<16x8xf32>, vector<8x16xf32>, vector<16x16xf32> -> vector<16x16xf32>
    %c4_35 = arith.constant 4 : index
    %c0_36 = arith.constant 0 : index
    %c0_37 = arith.constant 0 : index
    %34 = vector.load %arg3[%c4_35, %c0_36, %c0_37] : memref<6x16x16xf32, #tpu.memory_space<vmem>>, vector<1x16x16xf32>
    %35 = vector.shape_cast %34 : vector<1x16x16xf32> to vector<16x16xf32>
    %36 = vector.shape_cast %33 : vector<16x16xf32> to vector<1x16x16xf32>
    tpu.vector_store %arg3[%c4_35, %c0_36, %c0_37], %36 {strides = array<i32>} : memref<6x16x16xf32, #tpu.memory_space<vmem>>, vector<1x16x16xf32>,
    %c5 = arith.constant 5 : index
    %c0_38 = arith.constant 0 : index
    %c0_39 = arith.constant 0 : index
    %37 = vector.load %arg0[%c5, %c0_38, %c0_39] : memref<6x8x8xf32, #tpu.memory_space<vmem>>, vector<1x8x8xf32>
    %38 = vector.shape_cast %37 : vector<1x8x8xf32> to vector<8x8xf32>
    %cst_40 = arith.constant dense<0.000000e+00> : vector<16x8xf32>
    %39 = tpu.matmul %0, %38, %cst_40 {dimension_numbers = #tpu.dot_dimension_numbers<[1], [0], [0], [1], [0, 0, 1, 1], [], []>} : vector<16x8xf32>, vector<8x8xf32>, vector<16x8xf32> -> vector<16x8xf32>
    %cst_41 = arith.constant dense<0.000000e+00> : vector<16x16xf32>
    %40 = tpu.matmul %39, %1, %cst_41 {dimension_numbers = #tpu.dot_dimension_numbers<[1], [0], [0], [1], [0, 0, 1, 1], [], []>} : vector<16x8xf32>, vector<8x16xf32>, vector<16x16xf32> -> vector<16x16xf32>
    %c5_42 = arith.constant 5 : index
    %c0_43 = arith.constant 0 : index
    %c0_44 = arith.constant 0 : index
    %41 = vector.load %arg3[%c5_42, %c0_43, %c0_44] : memref<6x16x16xf32, #tpu.memory_space<vmem>>, vector<1x16x16xf32>
    %42 = vector.shape_cast %41 : vector<1x16x16xf32> to vector<16x16xf32>
    %43 = vector.shape_cast %40 : vector<16x16xf32> to vector<1x16x16xf32>
    tpu.vector_store %arg3[%c5_42, %c0_43, %c0_44], %43 {strides = array<i32>} : memref<6x16x16xf32, #tpu.memory_space<vmem>>, vector<1x16x16xf32>,
    return
  }
}

</mosaic_0001>

<llo_original>
// kernel: tpu_custom_call.1
$region0: #{tpu_custom_call.1}
  #allocation0 [shape = 'u32[]', space=smem, size = 0x4, offset = 0x4, fixed_abs, tag = 'smem constant byte address 0x4 - core index']
  #allocation1 [shape = 'u32[72,128]{1,0:T(1,128)}', space=vmem, size = 0x9000, scoped, tag = 'internal scratch']
  %s0 = inlined_call_operand.hbm [shape: f32[6,8,8], index: 0, kind: input, shape index: {}]
  %s1 = inlined_call_operand.vmem [shape: f32[16,8], index: 1, kind: input, shape index: {}]
  %s2 = inlined_call_operand.vmem [shape: f32[8,16], index: 2, kind: input, shape index: {}]
  %s3 = inlined_call_operand.hbm [shape: f32[6,16,16], index: 3, kind: output, shape index: {}]
  %s4 = sld [smem:[#allocation0]]
  $region26: #{tpu_custom_call.1} parent=0
    _
  %s6 = ssub.s32 1, %s4
  %s7 = scalar_select 0, %s6, %s4
  $region1: #{tpu_custom_call.1} parent=0
    #allocation2 [shape = 'u8[24576]{0}', space=vmem, size = 0x6000, scoped, tag = 'input window, operand 0, single buffered']
    #allocation3 [shape = 's32[1]{0}', space=sflag, size = 0x4, scoped, tag = 'scoped memory for tpu_custom_call.1']
    #allocation4 [shape = 's32[1]{0}', space=sflag, size = 0x4, scoped, tag = 'scoped memory for tpu_custom_call.1']
    #allocation5 [shape = 'u8[49152]{0}', space=vmem, size = 0xc000, scoped, tag = 'output window, operand 0, single buffered']
    %8 = vsyncpa [#allocation3], 0
    %9 = vsyncpa [#allocation4], 0
    // Predicated region
    $region2: #{tpu_custom_call.1} parent=1 // pred_check
      _
    $region3: #{tpu_custom_call.1} parent=1 // pred_check_branch
      %11 = sbr.rel (0) target = $region5
    $region4: #{tpu_custom_call.1} parent=1 // pred_region
      %13 = vsyncadd [#allocation3], 0
      %s14 = sshll.u32 %s0, 4
      %s15 = int_to_ptr.hbm [resolvable:$true] %s14
      %s16 = sshll.u32 [#allocation2], 4
      %s17 = int_to_ptr.vmem [resolvable:$true] %s16
      %22 = dma.hbm_to_vmem [thread:$0]  %s15, 768, %s17, [#allocation3], 128, 128, 8
    $region5: #{tpu_custom_call.1} parent=1 // pred_fallthru
      _
    // Predicated region
    $region6: #{tpu_custom_call.1} parent=1 // pred_check
      _
    $region7: #{tpu_custom_call.1} parent=1 // pred_check_branch
      %24 = sbr.rel (0) target = $region9
    $region8: #{tpu_custom_call.1} parent=1 // pred_region
      _
    $region9: #{tpu_custom_call.1} parent=1 // pred_fallthru
      _
    // Predicated region
    $region10: #{tpu_custom_call.1} parent=1 // pred_check
      _
    $region11: #{tpu_custom_call.1} parent=1 // pred_check_branch
      %26 = sbr.rel (0) target = $region13
    $region12: #{tpu_custom_call.1} parent=1 // pred_region
      _
    $region13: #{tpu_custom_call.1} parent=1 // pred_fallthru
      _
    // Predicated region
    $region14: #{tpu_custom_call.1} parent=1 // pred_check
      _
    $region15: #{tpu_custom_call.1} parent=1 // pred_check_branch
      %28 = sbr.rel (0) target = $region17
    $region16: #{tpu_custom_call.1} parent=1 // pred_region
      %30 = dma.done [#allocation3], 768
    $region17: #{tpu_custom_call.1} parent=1 // pred_fallthru
      _
    %v31 = vld [vmem:[%s1] sm:$0xff]
    %v32 = vld [vmem:[%s1 + $0x8] sm:$0xff]
    %v33 = vld [vmem:[%s2] sm:$0xff]
    %v34 = vld [vmem:[#allocation2] sm:$0xff]
    %vm35 = vcmask 64512
    %v37 = vsel %vm35, %v31, 0
    %v40 = vsel %vm35, %v32, 0
    %42 = vmatpush.msra.mxu0 0.0
    %43 = vmatpush.msra.mxu0 0.0
    %44 = vmatpush.msra.mxu0 0.0
    %45 = vmatpush.msra.mxu0 0.0
    %46 = vmatpush.msra.mxu0 0.0
    %47 = vmatpush.msra.mxu0 0.0
    %48 = vmatpush.msra.mxu0 0.0
    %49 = vmatpush.msra.mxu0 0.0
    %50 = vmatpush.msra.mxu0 0.0
    %51 = vmatpush.msra.mxu0 0.0
    %52 = vmatpush.msra.mxu0 0.0
    %53 = vmatpush.msra.mxu0 0.0
    %54 = vmatpush.msra.mxu0 0.0
    %55 = vmatpush.msra.mxu0 0.0
    %56 = vmatpush.msra.mxu0 0.0
    %57 = vmatpush.msra.mxu0 %v34
    %58 = vmatmul.f32.gmra.mxu0 %v37
    %v59 = vpop.f32.mrf.mxu0
    %v60 = vadd.f32 0.0, %v59
    %61 = vmatmul.f32.gmra.mxu0 %v40
    %v62 = vpop.f32.mrf.mxu0
    %v63 = vadd.f32 0.0, %v62
    %64 = vdwg.mxu0
    %v66 = vsel %vm35, %v60, 0
    %v69 = vsel %vm35, %v63, 0
    %71 = vmatpush.msra.mxu0 0.0
    %72 = vmatpush.msra.mxu0 0.0
    %73 = vmatpush.msra.mxu0 0.0
    %74 = vmatpush.msra.mxu0 0.0
    %75 = vmatpush.msra.mxu0 0.0
    %76 = vmatpush.msra.mxu0 0.0
    %77 = vmatpush.msra.mxu0 0.0
    %78 = vmatpush.msra.mxu0 0.0
    %79 = vmatpush.msra.mxu0 0.0
    %80 = vmatpush.msra.mxu0 0.0
    %81 = vmatpush.msra.mxu0 0.0
    %82 = vmatpush.msra.mxu0 0.0
    %83 = vmatpush.msra.mxu0 0.0
    %84 = vmatpush.msra.mxu0 0.0
    %85 = vmatpush.msra.mxu0 0.0
    %86 = vmatpush.msra.mxu0 %v33
    %87 = vmatmul.f32.gmra.mxu0 %v66
    %v88 = vpop.f32.mrf.mxu0
    %v89 = vadd.f32 0.0, %v88
    %90 = vmatmul.f32.gmra.mxu0 %v69
    %v91 = vpop.f32.mrf.mxu0
    %v92 = vadd.f32 0.0, %v91
    %93 = vdwg.mxu0
    %vm94 = vcmask 130048
    %95 = vst.msk [vmem:[#allocation5] sm:$0xff] %vm94, %v89
    %96 = vst.msk [vmem:[#allocation5 + $0x8] sm:$0xff] %vm94, %v92
    %s97 = scalar_lea.vmem [#allocation2], 8
    %v98 = vld [vmem:[%s97] sm:$0xff]
    %99 = vmatpush.msra.mxu0 0.0
    %100 = vmatpush.msra.mxu0 0.0
    %101 = vmatpush.msra.mxu0 0.0
    %102 = vmatpush.msra.mxu0 0.0
    %103 = vmatpush.msra.mxu0 0.0
    %104 = vmatpush.msra.mxu0 0.0
    %105 = vmatpush.msra.mxu0 0.0
    %106 = vmatpush.msra.mxu0 0.0
    %107 = vmatpush.msra.mxu0 0.0
    %108 = vmatpush.msra.mxu0 0.0
    %109 = vmatpush.msra.mxu0 0.0
    %110 = vmatpush.msra.mxu0 0.0
    %111 = vmatpush.msra.mxu0 0.0
    %112 = vmatpush.msra.mxu0 0.0
    %113 = vmatpush.msra.mxu0 0.0
    %114 = vmatpush.msra.mxu0 %v98
    %115 = vmatmul.f32.gmra.mxu0 %v37
    %v116 = vpop.f32.mrf.mxu0
    %v117 = vadd.f32 0.0, %v116
    %118 = vmatmul.f32.gmra.mxu0 %v40
    %v119 = vpop.f32.mrf.mxu0
    %v120 = vadd.f32 0.0, %v119
    %121 = vdwg.mxu0
    %v123 = vsel %vm35, %v117, 0
    %v126 = vsel %vm35, %v120, 0
    %128 = vmatpush.msra.mxu0 0.0
    %129 = vmatpush.msra.mxu0 0.0
    %130 = vmatpush.msra.mxu0 0.0
    %131 = vmatpush.msra.mxu0 0.0
    %132 = vmatpush.msra.mxu0 0.0
    %133 = vmatpush.msra.mxu0 0.0
    %134 = vmatpush.msra.mxu0 0.0
    %135 = vmatpush.msra.mxu0 0.0
    %136 = vmatpush.msra.mxu0 0.0
    %137 = vmatpush.msra.mxu0 0.0
    %138 = vmatpush.msra.mxu0 0.0
    %139 = vmatpush.msra.mxu0 0.0
    %140 = vmatpush.msra.mxu0 0.0
    %141 = vmatpush.msra.mxu0 0.0
    %142 = vmatpush.msra.mxu0 0.0
    %143 = vmatpush.msra.mxu0 %v33
    %144 = vmatmul.f32.gmra.mxu0 %v123
    %v145 = vpop.f32.mrf.mxu0
    %v146 = vadd.f32 0.0, %v145
    %147 = vmatmul.f32.gmra.mxu0 %v126
    %v148 = vpop.f32.mrf.mxu0
    %v149 = vadd.f32 0.0, %v148
    %150 = vdwg.mxu0
    %s151 = scalar_lea.vmem [#allocation5], 16
    %152 = vst.msk [vmem:[%s151] sm:$0xff] %vm94, %v146
    %153 = vst.msk [vmem:[%s151 + $0x8] sm:$0xff] %vm94, %v149
    %s154 = scalar_lea.vmem [#allocation2], 16
    %v155 = vld [vmem:[%s154] sm:$0xff]
    %156 = vmatpush.msra.mxu0 0.0
    %157 = vmatpush.msra.mxu0 0.0
    %158 = vmatpush.msra.mxu0 0.0
    %159 = vmatpush.msra.mxu0 0.0
    %160 = vmatpush.msra.mxu0 0.0
    %161 = vmatpush.msra.mxu0 0.0
    %162 = vmatpush.msra.mxu0 0.0
    %163 = vmatpush.msra.mxu0 0.0
    %164 = vmatpush.msra.mxu0 0.0
    %165 = vmatpush.msra.mxu0 0.0
    %166 = vmatpush.msra.mxu0 0.0
    %167 = vmatpush.msra.mxu0 0.0
    %168 = vmatpush.msra.mxu0 0.0
    %169 = vmatpush.msra.mxu0 0.0
    %170 = vmatpush.msra.mxu0 0.0
    %171 = vmatpush.msra.mxu0 %v155
    %172 = vmatmul.f32.gmra.mxu0 %v37
    %v173 = vpop.f32.mrf.mxu0
    %v174 = vadd.f32 0.0, %v173
    %175 = vmatmul.f32.gmra.mxu0 %v40
    %v176 = vpop.f32.mrf.mxu0
    %v177 = vadd.f32 0.0, %v176
    %178 = vdwg.mxu0
    %v180 = vsel %vm35, %v174, 0
    %v183 = vsel %vm35, %v177, 0
    %185 = vmatpush.msra.mxu0 0.0
    %186 = vmatpush.msra.mxu0 0.0
    %187 = vmatpush.msra.mxu0 0.0
    %188 = vmatpush.msra.mxu0 0.0
    %189 = vmatpush.msra.mxu0 0.0
    %190 = vmatpush.msra.mxu0 0.0
    %191 = vmatpush.msra.mxu0 0.0
    %192 = vmatpush.msra.mxu0 0.0
    %193 = vmatpush.msra.mxu0 0.0
    %194 = vmatpush.msra.mxu0 0.0
    %195 = vmatpush.msra.mxu0 0.0
    %196 = vmatpush.msra.mxu0 0.0
    %197 = vmatpush.msra.mxu0 0.0
    %198 = vmatpush.msra.mxu0 0.0
    %199 = vmatpush.msra.mxu0 0.0
    %200 = vmatpush.msra.mxu0 %v33
    %201 = vmatmul.f32.gmra.mxu0 %v180
    %v202 = vpop.f32.mrf.mxu0
    %v203 = vadd.f32 0.0, %v202
    %204 = vmatmul.f32.gmra.mxu0 %v183
    %v205 = vpop.f32.mrf.mxu0
    %v206 = vadd.f32 0.0, %v205
    %207 = vdwg.mxu0
    %s208 = scalar_lea.vmem [#allocation5], 32
    %209 = vst.msk [vmem:[%s208] sm:$0xff] %vm94, %v203
    %210 = vst.msk [vmem:[%s208 + $0x8] sm:$0xff] %vm94, %v206
    %s211 = scalar_lea.vmem [#allocation2], 24
    %v212 = vld [vmem:[%s211] sm:$0xff]
    %213 = vmatpush.msra.mxu0 0.0
    %214 = vmatpush.msra.mxu0 0.0
    %215 = vmatpush.msra.mxu0 0.0
    %216 = vmatpush.msra.mxu0 0.0
    %217 = vmatpush.msra.mxu0 0.0
    %218 = vmatpush.msra.mxu0 0.0
    %219 = vmatpush.msra.mxu0 0.0
    %220 = vmatpush.msra.mxu0 0.0
    %221 = vmatpush.msra.mxu0 0.0
    %222 = vmatpush.msra.mxu0 0.0
    %223 = vmatpush.msra.mxu0 0.0
    %224 = vmatpush.msra.mxu0 0.0
    %225 = vmatpush.msra.mxu0 0.0
    %226 = vmatpush.msra.mxu0 0.0
    %227 = vmatpush.msra.mxu0 0.0
    %228 = vmatpush.msra.mxu0 %v212
    %229 = vmatmul.f32.gmra.mxu0 %v37
    %v230 = vpop.f32.mrf.mxu0
    %v231 = vadd.f32 0.0, %v230
    %232 = vmatmul.f32.gmra.mxu0 %v40
    %v233 = vpop.f32.mrf.mxu0
    %v234 = vadd.f32 0.0, %v233
    %235 = vdwg.mxu0
    %v237 = vsel %vm35, %v231, 0
    %v240 = vsel %vm35, %v234, 0
    %242 = vmatpush.msra.mxu0 0.0
    %243 = vmatpush.msra.mxu0 0.0
    %244 = vmatpush.msra.mxu0 0.0
    %245 = vmatpush.msra.mxu0 0.0
    %246 = vmatpush.msra.mxu0 0.0
    %247 = vmatpush.msra.mxu0 0.0
    %248 = vmatpush.msra.mxu0 0.0
    %249 = vmatpush.msra.mxu0 0.0
    %250 = vmatpush.msra.mxu0 0.0
    %251 = vmatpush.msra.mxu0 0.0
    %252 = vmatpush.msra.mxu0 0.0
    %253 = vmatpush.msra.mxu0 0.0
    %254 = vmatpush.msra.mxu0 0.0
    %255 = vmatpush.msra.mxu0 0.0
    %256 = vmatpush.msra.mxu0 0.0
    %257 = vmatpush.msra.mxu0 %v33
    %258 = vmatmul.f32.gmra.mxu0 %v237
    %v259 = vpop.f32.mrf.mxu0
    %v260 = vadd.f32 0.0, %v259
    %261 = vmatmul.f32.gmra.mxu0 %v240
    %v262 = vpop.f32.mrf.mxu0
    %v263 = vadd.f32 0.0, %v262
    %264 = vdwg.mxu0
    %s265 = scalar_lea.vmem [#allocation5], 48
    %266 = vst.msk [vmem:[%s265] sm:$0xff] %vm94, %v260
    %267 = vst.msk [vmem:[%s265 + $0x8] sm:$0xff] %vm94, %v263
    %s268 = scalar_lea.vmem [#allocation2], 32
    %v269 = vld [vmem:[%s268] sm:$0xff]
    %270 = vmatpush.msra.mxu0 0.0
    %271 = vmatpush.msra.mxu0 0.0
    %272 = vmatpush.msra.mxu0 0.0
    %273 = vmatpush.msra.mxu0 0.0
    %274 = vmatpush.msra.mxu0 0.0
    %275 = vmatpush.msra.mxu0 0.0
    %276 = vmatpush.msra.mxu0 0.0
    %277 = vmatpush.msra.mxu0 0.0
    %278 = vmatpush.msra.mxu0 0.0
    %279 = vmatpush.msra.mxu0 0.0
    %280 = vmatpush.msra.mxu0 0.0
    %281 = vmatpush.msra.mxu0 0.0
    %282 = vmatpush.msra.mxu0 0.0
    %283 = vmatpush.msra.mxu0 0.0
    %284 = vmatpush.msra.mxu0 0.0
    %285 = vmatpush.msra.mxu0 %v269
    %286 = vmatmul.f32.gmra.mxu0 %v37
    %v287 = vpop.f32.mrf.mxu0
    %v288 = vadd.f32 0.0, %v287
    %289 = vmatmul.f32.gmra.mxu0 %v40
    %v290 = vpop.f32.mrf.mxu0
    %v291 = vadd.f32 0.0, %v290
    %292 = vdwg.mxu0
    %v294 = vsel %vm35, %v288, 0
    %v297 = vsel %vm35, %v291, 0
    %299 = vmatpush.msra.mxu0 0.0
    %300 = vmatpush.msra.mxu0 0.0
    %301 = vmatpush.msra.mxu0 0.0
    %302 = vmatpush.msra.mxu0 0.0
    %303 = vmatpush.msra.mxu0 0.0
    %304 = vmatpush.msra.mxu0 0.0
    %305 = vmatpush.msra.mxu0 0.0
    %306 = vmatpush.msra.mxu0 0.0
    %307 = vmatpush.msra.mxu0 0.0
    %308 = vmatpush.msra.mxu0 0.0
    %309 = vmatpush.msra.mxu0 0.0
    %310 = vmatpush.msra.mxu0 0.0
    %311 = vmatpush.msra.mxu0 0.0
    %312 = vmatpush.msra.mxu0 0.0
    %313 = vmatpush.msra.mxu0 0.0
    %314 = vmatpush.msra.mxu0 %v33
    %315 = vmatmul.f32.gmra.mxu0 %v294
    %v316 = vpop.f32.mrf.mxu0
    %v317 = vadd.f32 0.0, %v316
    %318 = vmatmul.f32.gmra.mxu0 %v297
    %v319 = vpop.f32.mrf.mxu0
    %v320 = vadd.f32 0.0, %v319
    %321 = vdwg.mxu0
    %s322 = scalar_lea.vmem [#allocation5], 64
    %323 = vst.msk [vmem:[%s322] sm:$0xff] %vm94, %v317
    %324 = vst.msk [vmem:[%s322 + $0x8] sm:$0xff] %vm94, %v320
    %s325 = scalar_lea.vmem [#allocation2], 40
    %v326 = vld [vmem:[%s325] sm:$0xff]
    %327 = vmatpush.msra.mxu0 0.0
    %328 = vmatpush.msra.mxu0 0.0
    %329 = vmatpush.msra.mxu0 0.0
    %330 = vmatpush.msra.mxu0 0.0
    %331 = vmatpush.msra.mxu0 0.0
    %332 = vmatpush.msra.mxu0 0.0
    %333 = vmatpush.msra.mxu0 0.0
    %334 = vmatpush.msra.mxu0 0.0
    %335 = vmatpush.msra.mxu0 0.0
    %336 = vmatpush.msra.mxu0 0.0
    %337 = vmatpush.msra.mxu0 0.0
    %338 = vmatpush.msra.mxu0 0.0
    %339 = vmatpush.msra.mxu0 0.0
    %340 = vmatpush.msra.mxu0 0.0
    %341 = vmatpush.msra.mxu0 0.0
    %342 = vmatpush.msra.mxu0 %v326
    %343 = vmatmul.f32.gmra.mxu0 %v37
    %v344 = vpop.f32.mrf.mxu0
    %v345 = vadd.f32 0.0, %v344
    %346 = vmatmul.f32.gmra.mxu0 %v40
    %v347 = vpop.f32.mrf.mxu0
    %v348 = vadd.f32 0.0, %v347
    %349 = vdwg.mxu0
    %v351 = vsel %vm35, %v345, 0
    %v354 = vsel %vm35, %v348, 0
    %356 = vmatpush.msra.mxu0 0.0
    %357 = vmatpush.msra.mxu0 0.0
    %358 = vmatpush.msra.mxu0 0.0
    %359 = vmatpush.msra.mxu0 0.0
    %360 = vmatpush.msra.mxu0 0.0
    %361 = vmatpush.msra.mxu0 0.0
    %362 = vmatpush.msra.mxu0 0.0
    %363 = vmatpush.msra.mxu0 0.0
    %364 = vmatpush.msra.mxu0 0.0
    %365 = vmatpush.msra.mxu0 0.0
    %366 = vmatpush.msra.mxu0 0.0
    %367 = vmatpush.msra.mxu0 0.0
    %368 = vmatpush.msra.mxu0 0.0
    %369 = vmatpush.msra.mxu0 0.0
    %370 = vmatpush.msra.mxu0 0.0
    %371 = vmatpush.msra.mxu0 %v33
    %372 = vmatmul.f32.gmra.mxu0 %v351
    %v373 = vpop.f32.mrf.mxu0
    %v374 = vadd.f32 0.0, %v373
    %375 = vmatmul.f32.gmra.mxu0 %v354
    %v376 = vpop.f32.mrf.mxu0
    %v377 = vadd.f32 0.0, %v376
    %378 = vdwg.mxu0
    %s379 = scalar_lea.vmem [#allocation5], 80
    %380 = vst.msk [vmem:[%s379] sm:$0xff] %vm94, %v374
    %381 = vst.msk [vmem:[%s379 + $0x8] sm:$0xff] %vm94, %v377
    // Predicated region
    $region18: #{tpu_custom_call.1} parent=1 // pred_check
      _
    $region19: #{tpu_custom_call.1} parent=1 // pred_check_branch
      %383 = sbr.rel (0) target = $region21
    $region20: #{tpu_custom_call.1} parent=1 // pred_region
      %385 = vsyncadd [#allocation4], 0
      %s386 = sshll.u32 [#allocation5], 4
      %s387 = int_to_ptr.vmem [resolvable:$true] %s386
      %s388 = sshll.u32 %s3, 4
      %s389 = int_to_ptr.hbm [resolvable:$true] %s388
      %394 = dma.vmem_to_hbm [thread:$0]  %s387, 1536, %s389, [#allocation4], 128, 128, 8
    $region21: #{tpu_custom_call.1} parent=1 // pred_fallthru
      _
    // Predicated region
    $region22: #{tpu_custom_call.1} parent=1 // pred_check
      _
    $region23: #{tpu_custom_call.1} parent=1 // pred_check_branch
      %396 = sbr.rel (0) target = $region25
    $region24: #{tpu_custom_call.1} parent=1 // pred_region
      %398 = dma.done [#allocation4], 1536
    $region25: #{tpu_custom_call.1} parent=1 // pred_fallthru
      _
    %399 = vsyncpa [#allocation3], 1
    %400 = vsyncpa [#allocation4], 1

</llo_original>
